<compile_context>
chip_gen: v7x
topology: tpu7x:2x2x1
jax: 0.10.0
libtpu: 0.0.40
codegen_flags: <defaults>
</compile_context>

<pallas_src>
import functools
import math

import jax
import jax.numpy as jnp
from jax.experimental import pallas as pl
from jax.experimental.pallas import tpu as pltpu

BN_EPS = 1e-5
# MXU operand dtype.  bf16 is the native fast path on v6e/v7x (and fine on v5e
# as long as elementwise math stays f32, which it does below); accumulation is
# always f32 via preferred_element_type.
MXU_DTYPE = jnp.bfloat16
_MXU_ITEMSIZE = 2 if MXU_DTYPE == jnp.bfloat16 else 4


# ----------------------------- Pallas kernel ------------------------------
def _conv_stats_kernel(*refs, img_rows, apply_pre):
    """Fused (optional BN-affine+ReLU) -> 3x3 conv -> partial BN stats.

    refs (apply_pre=True):  x, w, a_pre, c_pre, y, stat
    refs (apply_pre=False): x, w, y, stat
      x:    (Nb*H, W*Cin)      Nb whole images, channels innermost in lanes
      w:    (3*W*Cin, W*Cout)  stacked banded Toeplitz weight (dy = 0,1,2)
      a/c:  (1, W*Cin)         fused BN+ReLU affine for the *input* (conv2 path)
      y:    (Nb*H, W*Cout)     pre-BN conv output (lane-dense)
      stat: (1, 2, W*Cout)     per-lane [sum; sum-of-squares] for this block
    """
    if apply_pre:
        x_ref, w_ref, apre_ref, cpre_ref, y_ref, stat_ref = refs
    else:
        x_ref, w_ref, y_ref, stat_ref = refs

    x = x_ref[...].astype(jnp.float32)                       # (M, W*Cin)
    if apply_pre:
        # Previous ConvBlock's BatchNorm + ReLU, fused into this pass (f32 VPU).
        x = jnp.maximum(x * apre_ref[...] + cpre_ref[...], 0.0)

    # Height halo via sublane shift + per-image boundary masking.  Rows outside
    # an image contribute zero, matching "SAME" zero padding of the (activated)
    # input; the % img_rows mask also kills bleed across the Nb stacked images.
    row = jax.lax.broadcasted_iota(jnp.int32, x.shape, 0)
    zero_row = jnp.zeros_like(x[:1])
    shift_dn = jnp.concatenate([zero_row, x[:-1, :]], axis=0)   # row y -> x[y-1]
    shift_up = jnp.concatenate([x[1:, :], zero_row], axis=0)    # row y -> x[y+1]
    prev = jnp.where(row % img_rows == 0, 0.0, shift_dn)
    nxt = jnp.where(row % img_rows == img_rows - 1, 0.0, shift_up)

    # One K = 3*W*Cin MXU matmul instead of three K = W*Cin matmuls + VPU adds.
    lhs = jnp.concatenate(
        [prev.astype(MXU_DTYPE), x.astype(MXU_DTYPE), nxt.astype(MXU_DTYPE)],
        axis=-1)                                              # (M, 3*W*Cin)
    acc = jnp.dot(lhs, w_ref[...], preferred_element_type=jnp.float32)

    y_ref[...] = acc.astype(y_ref.dtype)

    # Partial BN statistics (per lane), emitted as a single stacked store.
    s = jnp.sum(acc, axis=0, keepdims=True)                   # (1, W*Cout)
    sq = jnp.sum(acc * acc, axis=0, keepdims=True)            # (1, W*Cout)
    stat_ref[0] = jnp.concatenate([s, sq], axis=0)            # (2, W*Cout)


# ------------------------------ host helpers ------------------------------
def _stacked_toeplitz(w_hwio, width):
    """Fold width taps + zero padding into one stacked (3*W*Cin, W*Cout) matrix."""
    kh, kw, cin, cout = w_hwio.shape
    xi = jnp.arange(width)[:, None]          # input column
    xo = jnp.arange(width)[None, :]          # output column
    dx = xi - xo + (kw // 2)                 # kernel column tap
    valid = (dx >= 0) & (dx <= kw - 1)
    dxc = jnp.clip(dx, 0, kw - 1)
    mats = []
    for dy in range(kh):
        taps = w_hwio[dy][dxc]                                  # (W, W, Cin, Cout)
        taps = jnp.where(valid[:, :, None, None], taps, 0.0)
        mats.append(taps.transpose(0, 2, 1, 3).reshape(width * cin, width * cout))
    return jnp.concatenate(mats, axis=0).astype(MXU_DTYPE)     # (3*W*Cin, W*Cout)


def _padded_channels(cin, width):
    """Smallest cin' >= cin with width*cin' % 128 == 0 (skip if > 2x padding)."""
    if (width * cin) % 128 == 0:
        return cin
    step = 128 // math.gcd(width, 128)
    cin_p = -(-cin // step) * step
    return cin_p if cin_p <= 2 * cin else cin


def _target_m():
    kind = jax.devices()[0].device_kind.lower()
    return 128 if "v5" in kind else 256      # MXU rows: 128 on v5e, 256 on v6e/v7x


def _pick_nb(n_imgs, img_rows):
    """Images per grid step: largest divisor of N with Nb*H <= target MXU rows."""
    target = _target_m()
    cands = [nb for nb in range(1, n_imgs + 1)
             if n_imgs % nb == 0 and ((nb * img_rows) % 8 == 0 or nb == n_imgs)]
    fitting = [nb for nb in cands if nb * img_rows <= target]
    return max(fitting) if fitting else min(cands)


def _vmem_limit_bytes(block_rows, w_cin, w_cout):
    x_blk = block_rows * w_cin * 4
    y_blk = block_rows * w_cout * 4
    w_res = 3 * w_cin * w_cout * _MXU_ITEMSIZE
    tmp = 4 * x_blk + block_rows * 3 * w_cin * _MXU_ITEMSIZE + y_blk
    need = 2 * (x_blk + y_blk + 2 * w_cout * 4) + 2 * w_res + tmp + (4 << 20)
    kind = jax.devices()[0].device_kind.lower()
    budget = (48 << 20) if "v7" in kind else (96 << 20)   # v7x: 64 MiB physical
    return int(min(budget, max(32 << 20, need)))


def _conv_pass(x2d, w_stacked, nb, img_rows, a_pre=None, c_pre=None):
    """One 3x3 conv pass over a (rows, W*Cin) slab -> pre-BN output + stats."""
    rows, w_cin = x2d.shape
    w_cout = w_stacked.shape[1]
    block_rows = nb * img_rows
    grid = rows // block_rows

    apply_pre = a_pre is not None
    kernel = functools.partial(_conv_stats_kernel,
                               img_rows=img_rows, apply_pre=apply_pre)

    in_specs = [
        pl.BlockSpec((block_rows, w_cin), lambda i: (i, 0)),
        pl.BlockSpec((3 * w_cin, w_cout), lambda i: (0, 0)),   # resident weight
    ]
    args = [x2d, w_stacked]
    if apply_pre:
        in_specs += [pl.BlockSpec((1, w_cin), lambda i: (0, 0)),
                     pl.BlockSpec((1, w_cin), lambda i: (0, 0))]
        args += [jnp.asarray(a_pre, jnp.float32).reshape(1, w_cin),
                 jnp.asarray(c_pre, jnp.float32).reshape(1, w_cin)]

    y, stats = pl.pallas_call(
        kernel,
        grid=(grid,),
        in_specs=in_specs,
        out_specs=(pl.BlockSpec((block_rows, w_cout), lambda i: (i, 0)),
                   pl.BlockSpec((1, 2, w_cout), lambda i: (i, 0, 0))),
        out_shape=(jax.ShapeDtypeStruct((rows, w_cout), jnp.float32),
                   jax.ShapeDtypeStruct((grid, 2, w_cout), jnp.float32)),
        compiler_params=pltpu.CompilerParams(
            dimension_semantics=("parallel",),
            vmem_limit_bytes=_vmem_limit_bytes(block_rows, w_cin, w_cout)),
    )(*args)
    return y, stats


def _bn_affine(stats, gamma, beta, count, cout):
    """Fold partial sums into the per-channel BN affine (scale, shift)."""
    col = jnp.sum(stats.astype(jnp.float32), axis=0)        # (2, W*Cout)
    s = col[0].reshape(-1, cout).sum(axis=0)                 # (Cout,)
    sq = col[1].reshape(-1, cout).sum(axis=0)
    mean = s / count
    # TODO(synk): E[x^2]-E[x]^2 is cancellation-prone if activations grow large;
    # switch to a centered/Welford fold if this block is stacked deep.
    var = jnp.maximum(sq / count - mean * mean, 0.0)         # biased variance
    scale = gamma * jax.lax.rsqrt(var + BN_EPS)
    shift = beta - mean * scale
    return scale, shift


def enc_block(x_nchw, params):
    """EncBlock forward: two ConvBlocks.  Input/output NCHW (PyTorch layout)."""
    n, cin, h, w = x_nchw.shape
    cout = params["w1"].shape[-1]
    count = n * h * w

    # Pad conv1 input channels so W*Cin is a multiple of 128 (lane-dense loads).
    cin_p = _padded_channels(cin, w)
    w1 = params["w1"]
    if cin_p != cin:
        x_nchw = jnp.pad(x_nchw, ((0, 0), (0, cin_p - cin), (0, 0), (0, 0)))
        w1 = jnp.pad(w1, ((0, 0), (0, 0), (0, cin_p - cin), (0, 0)))

    # NCHW -> lane-dense (N*H, W*C) slab.
    x = jnp.transpose(x_nchw, (0, 2, 3, 1)).reshape(n * h, w * cin_p)

    wst1 = _stacked_toeplitz(w1, w)               # (3*W*Cin_p, W*Cout)
    wst2 = _stacked_toeplitz(params["w2"], w)     # (3*W*Cout,  W*Cout)

    nb = _pick_nb(n, h)

    # ConvBlock 1: conv + partial BN stats.  (Conv bias dropped: exactly
    # cancelled by the batch-statistics mean subtraction.)
    y1, s1 = _conv_pass(x, wst1, nb, h)
    a1, c1 = _bn_affine(s1, params["g1"], params["beta1"], count, cout)

    # ConvBlock 2: conv1's BN + ReLU fused into conv2's input read.
    y2, s2 = _conv_pass(y1, wst2, nb, h, jnp.tile(a1, w), jnp.tile(c1, w))
    a2, c2 = _bn_affine(s2, params["g2"], params["beta2"], count, cout)

    # Epilogue: conv2's BN + ReLU, fused by XLA into the layout change back to
    # NCHW (cheaper than a separate elementwise pallas_call at these sizes).
    out = jnp.maximum(y2 * jnp.tile(a2, w)[None, :] + jnp.tile(c2, w)[None, :], 0.0)
    return jnp.transpose(out.reshape(n, h, w, cout), (0, 3, 1, 2))


# ---------------- pure-JAX reference (for verification) ----------------
def _ref_conv_bn_relu(x_nchw, w_hwio, b, gamma, beta):
    w_oihw = jnp.transpose(w_hwio, (3, 2, 0, 1))
    y = jax.lax.conv_general_dilated(
        x_nchw, w_oihw, window_strides=(1, 1), padding="SAME",
        dimension_numbers=("NCHW", "OIHW", "NCHW"))
    y = y + b[None, :, None, None]
    mean = jnp.mean(y, axis=(0, 2, 3), keepdims=True)
    var = jnp.mean((y - mean) ** 2, axis=(0, 2, 3), keepdims=True)
    y = (y - mean) / jnp.sqrt(var + BN_EPS)
    y = y * gamma[None, :, None, None] + beta[None, :, None, None]
    return jnp.maximum(y, 0.0)


def _ref_enc_block(x_nchw, p):
    y = _ref_conv_bn_relu(x_nchw, p["w1"], p["b1"], p["g1"], p["beta1"])
    y = _ref_conv_bn_relu(y, p["w2"], p["b2"], p["g2"], p["beta2"])
    return y


if __name__ == "__main__":
    # Small shapes consistent with EncBlock(in_channels=4, out_channels=8).
    N, Cin, Cout, H, W = 2, 4, 8, 16, 16

    key = jax.random.PRNGKey(0)
    kx, kw1, kb1, kw2, kb2 = jax.random.split(key, 5)

    x = jax.random.normal(kx, (N, Cin, H, W), dtype=jnp.float32)  # NCHW

    fan1, fan2 = Cin * 9, Cout * 9
    params = {
        # conv weights stored HWIO (3, 3, Cin, Cout)
        "w1": jax.random.normal(kw1, (3, 3, Cin, Cout), jnp.float32) / jnp.sqrt(fan1),
        "b1": jax.random.normal(kb1, (Cout,), jnp.float32) * 0.1,
        "g1": jnp.ones((Cout,), jnp.float32),      # BN weight init (PyTorch default)
        "beta1": jnp.zeros((Cout,), jnp.float32),  # BN bias init
        "w2": jax.random.normal(kw2, (3, 3, Cout, Cout), jnp.float32) / jnp.sqrt(fan2),
        "b2": jax.random.normal(kb2, (Cout,), jnp.float32) * 0.1,
        "g2": jnp.ones((Cout,), jnp.float32),
        "beta2": jnp.zeros((Cout,), jnp.float32),
    }

    out = jax.block_until_ready(jax.jit(enc_block)(x, params))
    ref = jax.block_until_ready(_ref_enc_block(x, params))

    assert out.shape == (N, Cout, H, W), out.shape
    # bf16 MXU operands (f32 accumulation) -> looser tolerance than pure f32.
    tol = 1e-3 if MXU_DTYPE == jnp.float32 else 5e-2
    max_err = float(jnp.max(jnp.abs(out - ref)))
    assert max_err <= tol, f"max abs err {max_err} > {tol}"
    print("KERNEL_OK")
</pallas_src>

<mosaic_0001>
module attributes {stable_mosaic.version = 11 : i64} {
  func.func @_conv_stats_kernel(%arg0: i32, %arg1: memref<32x128xf32, #tpu.memory_space<vmem>>, %arg2: memref<384x128xbf16, #tpu.memory_space<vmem>>, %arg3: memref<32x128xf32, #tpu.memory_space<vmem>>, %arg4: memref<1x2x128xf32, #tpu.memory_space<vmem>>) attributes {dimension_semantics = [#tpu.dimension_semantics<parallel>], iteration_bounds = array<i64: 1>, scalar_prefetch = 0 : i64, scratch_operands = 0 : i64, tpu.core_type = #tpu.core_type<tc>, window_params = [{transform_indices = @transform_0, window_bounds = array<i64: 32, 128>}, {pipeline_mode = #tpu.pipeline_mode<synchronous>, transform_indices = @transform_1, window_bounds = array<i64: 384, 128>}, {transform_indices = @transform_2, window_bounds = array<i64: 32, 128>}, {transform_indices = @transform_3, window_bounds = array<i64: 1, 2, 128>}]} {
    %c0 = arith.constant 0 : index
    %c0_0 = arith.constant 0 : index
    %0 = vector.load %arg1[%c0, %c0_0] : memref<32x128xf32, #tpu.memory_space<vmem>>, vector<32x128xf32>
    %1 = tpu.iota {dimensions = array<i32: 0>} : vector<32x128xi32>
    %cst = arith.constant 0.000000e+00 : f32
    %2 = vector.broadcast %cst : f32 to vector<1x128xf32>
    %3 = vector.extract_strided_slice %0 {offsets = [0, 0], sizes = [31, 128], strides = [1, 1]} : vector<32x128xf32> to vector<31x128xf32>
    %4 = tpu.concatenate %2, %3 in 0 : vector<1x128xf32>, vector<31x128xf32> -> vector<32x128xf32>
    %5 = vector.extract_strided_slice %0 {offsets = [1, 0], sizes = [31, 128], strides = [1, 1]} : vector<32x128xf32> to vector<31x128xf32>
    %6 = tpu.concatenate %5, %2 in 0 : vector<31x128xf32>, vector<1x128xf32> -> vector<32x128xf32>
    %c16_i32 = arith.constant 16 : i32
    %c0_i32 = arith.constant 0 : i32
    %7 = arith.cmpi eq, %c16_i32, %c0_i32 : i32
    %c1_i32 = arith.constant 1 : i32
    %8 = arith.select %7, %c1_i32, %c16_i32 : i32
    %9 = vector.broadcast %8 : i32 to vector<32x128xi32>
    %10 = arith.remsi %1, %9 : vector<32x128xi32>
    %c0_i32_1 = arith.constant 0 : i32
    %11 = vector.broadcast %c0_i32_1 : i32 to vector<32x128xi32>
    %12 = arith.cmpi ne, %10, %11 : vector<32x128xi32>
    %c0_i32_2 = arith.constant 0 : i32
    %13 = vector.broadcast %c0_i32_2 : i32 to vector<32x128xi32>
    %14 = arith.cmpi slt, %10, %13 : vector<32x128xi32>
    %c0_i32_3 = arith.constant 0 : i32
    %15 = arith.cmpi slt, %8, %c0_i32_3 : i32
    %16 = vector.broadcast %15 : i1 to vector<32x128xi1>
    %17 = vector.broadcast %16 : vector<32x128xi1> to vector<32x128xi1>
    %18 = arith.xori %14, %17 : vector<32x128xi1>
    %19 = arith.andi %18, %12 : vector<32x128xi1>
    %20 = vector.broadcast %8 : i32 to vector<32x128xi32>
    %21 = arith.addi %10, %20 : vector<32x128xi32>
    %22 = arith.select %19, %21, %10 : vector<32x128xi1>, vector<32x128xi32>
    %c0_i32_4 = arith.constant 0 : i32
    %23 = vector.broadcast %c0_i32_4 : i32 to vector<32x128xi32>
    %24 = arith.cmpi eq, %22, %23 : vector<32x128xi32>
    %cst_5 = arith.constant 0.000000e+00 : f32
    %25 = vector.broadcast %cst_5 : f32 to vector<32x128xf32>
    %26 = arith.select %24, %25, %4 : vector<32x128xi1>, vector<32x128xf32>
    %c16_i32_6 = arith.constant 16 : i32
    %c0_i32_7 = arith.constant 0 : i32
    %27 = arith.cmpi eq, %c16_i32_6, %c0_i32_7 : i32
    %c1_i32_8 = arith.constant 1 : i32
    %28 = arith.select %27, %c1_i32_8, %c16_i32_6 : i32
    %29 = vector.broadcast %28 : i32 to vector<32x128xi32>
    %30 = arith.remsi %1, %29 : vector<32x128xi32>
    %c0_i32_9 = arith.constant 0 : i32
    %31 = vector.broadcast %c0_i32_9 : i32 to vector<32x128xi32>
    %32 = arith.cmpi ne, %30, %31 : vector<32x128xi32>
    %c0_i32_10 = arith.constant 0 : i32
    %33 = vector.broadcast %c0_i32_10 : i32 to vector<32x128xi32>
    %34 = arith.cmpi slt, %30, %33 : vector<32x128xi32>
    %c0_i32_11 = arith.constant 0 : i32
    %35 = arith.cmpi slt, %28, %c0_i32_11 : i32
    %36 = vector.broadcast %35 : i1 to vector<32x128xi1>
    %37 = vector.broadcast %36 : vector<32x128xi1> to vector<32x128xi1>
    %38 = arith.xori %34, %37 : vector<32x128xi1>
    %39 = arith.andi %38, %32 : vector<32x128xi1>
    %40 = vector.broadcast %28 : i32 to vector<32x128xi32>
    %41 = arith.addi %30, %40 : vector<32x128xi32>
    %42 = arith.select %39, %41, %30 : vector<32x128xi1>, vector<32x128xi32>
    %c15_i32 = arith.constant 15 : i32
    %43 = vector.broadcast %c15_i32 : i32 to vector<32x128xi32>
    %44 = arith.cmpi eq, %42, %43 : vector<32x128xi32>
    %cst_12 = arith.constant 0.000000e+00 : f32
    %45 = vector.broadcast %cst_12 : f32 to vector<32x128xf32>
    %46 = arith.select %44, %45, %6 : vector<32x128xi1>, vector<32x128xf32>
    %47 = arith.truncf %26 : vector<32x128xf32> to vector<32x128xbf16>
    %48 = arith.truncf %0 : vector<32x128xf32> to vector<32x128xbf16>
    %49 = arith.truncf %46 : vector<32x128xf32> to vector<32x128xbf16>
    %50 = tpu.concatenate %47, %48, %49 in 1 : vector<32x128xbf16>, vector<32x128xbf16>, vector<32x128xbf16> -> vector<32x384xbf16>
    %c0_13 = arith.constant 0 : index
    %c0_14 = arith.constant 0 : index
    %51 = vector.load %arg2[%c0_13, %c0_14] : memref<384x128xbf16, #tpu.memory_space<vmem>>, vector<384x128xbf16>
    %cst_15 = arith.constant dense<0.000000e+00> : vector<32x128xf32>
    %52 = tpu.matmul %50, %51, %cst_15 {dimension_numbers = #tpu.dot_dimension_numbers<[1], [0], [0], [1], [0, 0, 1, 1], [], []>} : vector<32x384xbf16>, vector<384x128xbf16>, vector<32x128xf32> -> vector<32x128xf32>
    %c0_16 = arith.constant 0 : index
    %c0_17 = arith.constant 0 : index
    %53 = vector.load %arg3[%c0_16, %c0_17] : memref<32x128xf32, #tpu.memory_space<vmem>>, vector<32x128xf32>
    tpu.vector_store %arg3[%c0_16, %c0_17], %52 {strides = array<i32>} : memref<32x128xf32, #tpu.memory_space<vmem>>, vector<32x128xf32>,
    %cst_18 = arith.constant dense<0.000000e+00> : vector<128xf32>
    %54 = vector.multi_reduction <add>, %52, %cst_18 [0] : vector<32x128xf32> to vector<128xf32>
    %55 = vector.shape_cast %54 : vector<128xf32> to vector<1x128xf32>
    %56 = arith.mulf %52, %52 : vector<32x128xf32>
    %cst_19 = arith.constant dense<0.000000e+00> : vector<128xf32>
    %57 = vector.multi_reduction <add>, %56, %cst_19 [0] : vector<32x128xf32> to vector<128xf32>
    %58 = vector.shape_cast %57 : vector<128xf32> to vector<1x128xf32>
    %59 = tpu.concatenate %55, %58 in 0 : vector<1x128xf32>, vector<1x128xf32> -> vector<2x128xf32>
    %c0_20 = arith.constant 0 : index
    %c0_21 = arith.constant 0 : index
    %c0_22 = arith.constant 0 : index
    %60 = vector.load %arg4[%c0_20, %c0_21, %c0_22] : memref<1x2x128xf32, #tpu.memory_space<vmem>>, vector<1x2x128xf32>
    %61 = vector.shape_cast %60 : vector<1x2x128xf32> to vector<2x128xf32>
    %62 = vector.shape_cast %59 : vector<2x128xf32> to vector<1x2x128xf32>
    tpu.vector_store %arg4[%c0_20, %c0_21, %c0_22], %62 {strides = array<i32>} : memref<1x2x128xf32, #tpu.memory_space<vmem>>, vector<1x2x128xf32>,
    return
  }
  func.func @transform_0(%arg0: i32) -> (i32, i32) {
    %c0_i32 = arith.constant 0 : i32
    %c0_i32_0 = arith.constant 0 : i32
    return %arg0, %c0_i32 : i32, i32
  }
  func.func @transform_1(%arg0: i32) -> (i32, i32) {
    %c0_i32 = arith.constant 0 : i32
    %c0_i32_0 = arith.constant 0 : i32
    %c0_i32_1 = arith.constant 0 : i32
    return %c0_i32, %c0_i32_0 : i32, i32
  }
  func.func @transform_2(%arg0: i32) -> (i32, i32) {
    %c0_i32 = arith.constant 0 : i32
    %c0_i32_0 = arith.constant 0 : i32
    return %arg0, %c0_i32 : i32, i32
  }
  func.func @transform_3(%arg0: i32) -> (i32, i32, i32) {
    %c0_i32 = arith.constant 0 : i32
    %c0_i32_0 = arith.constant 0 : i32
    %c0_i32_1 = arith.constant 0 : i32
    return %arg0, %c0_i32, %c0_i32_0 : i32, i32, i32
  }
}

module attributes {stable_mosaic.version = 11 : i64} {
  func.func @_conv_stats_kernel(%arg0: i32, %arg1: memref<32x128xf32, #tpu.memory_space<vmem>>, %arg2: memref<384x128xbf16, #tpu.memory_space<vmem>>, %arg3: memref<1x128xf32, #tpu.memory_space<vmem>>, %arg4: memref<1x128xf32, #tpu.memory_space<vmem>>, %arg5: memref<32x128xf32, #tpu.memory_space<vmem>>, %arg6: memref<1x2x128xf32, #tpu.memory_space<vmem>>) attributes {dimension_semantics = [#tpu.dimension_semantics<parallel>], iteration_bounds = array<i64: 1>, scalar_prefetch = 0 : i64, scratch_operands = 0 : i64, tpu.core_type = #tpu.core_type<tc>, window_params = [{transform_indices = @transform_0, window_bounds = array<i64: 32, 128>}, {pipeline_mode = #tpu.pipeline_mode<synchronous>, transform_indices = @transform_1, window_bounds = array<i64: 384, 128>}, {pipeline_mode = #tpu.pipeline_mode<synchronous>, transform_indices = @transform_2, window_bounds = array<i64: 1, 128>}, {pipeline_mode = #tpu.pipeline_mode<synchronous>, transform_indices = @transform_3, window_bounds = array<i64: 1, 128>}, {transform_indices = @transform_4, window_bounds = array<i64: 32, 128>}, {transform_indices = @transform_5, window_bounds = array<i64: 1, 2, 128>}]} {
    %c0 = arith.constant 0 : index
    %c0_0 = arith.constant 0 : index
    %0 = vector.load %arg1[%c0, %c0_0] : memref<32x128xf32, #tpu.memory_space<vmem>>, vector<32x128xf32>
    %c0_1 = arith.constant 0 : index
    %c0_2 = arith.constant 0 : index
    %1 = vector.load %arg3[%c0_1, %c0_2] : memref<1x128xf32, #tpu.memory_space<vmem>>, vector<1x128xf32>
    %2 = vector.broadcast %1 : vector<1x128xf32> to vector<32x128xf32>
    %3 = arith.mulf %0, %2 : vector<32x128xf32>
    %c0_3 = arith.constant 0 : index
    %c0_4 = arith.constant 0 : index
    %4 = vector.load %arg4[%c0_3, %c0_4] : memref<1x128xf32, #tpu.memory_space<vmem>>, vector<1x128xf32>
    %5 = vector.broadcast %4 : vector<1x128xf32> to vector<32x128xf32>
    %6 = arith.addf %3, %5 : vector<32x128xf32>
    %cst = arith.constant 0.000000e+00 : f32
    %7 = vector.broadcast %cst : f32 to vector<32x128xf32>
    %8 = arith.maximumf %6, %7 : vector<32x128xf32>
    %9 = tpu.iota {dimensions = array<i32: 0>} : vector<32x128xi32>
    %cst_5 = arith.constant 0.000000e+00 : f32
    %10 = vector.broadcast %cst_5 : f32 to vector<1x128xf32>
    %11 = vector.extract_strided_slice %8 {offsets = [0, 0], sizes = [31, 128], strides = [1, 1]} : vector<32x128xf32> to vector<31x128xf32>
    %12 = tpu.concatenate %10, %11 in 0 : vector<1x128xf32>, vector<31x128xf32> -> vector<32x128xf32>
    %13 = vector.extract_strided_slice %8 {offsets = [1, 0], sizes = [31, 128], strides = [1, 1]} : vector<32x128xf32> to vector<31x128xf32>
    %14 = tpu.concatenate %13, %10 in 0 : vector<31x128xf32>, vector<1x128xf32> -> vector<32x128xf32>
    %c16_i32 = arith.constant 16 : i32
    %c0_i32 = arith.constant 0 : i32
    %15 = arith.cmpi eq, %c16_i32, %c0_i32 : i32
    %c1_i32 = arith.constant 1 : i32
    %16 = arith.select %15, %c1_i32, %c16_i32 : i32
    %17 = vector.broadcast %16 : i32 to vector<32x128xi32>
    %18 = arith.remsi %9, %17 : vector<32x128xi32>
    %c0_i32_6 = arith.constant 0 : i32
    %19 = vector.broadcast %c0_i32_6 : i32 to vector<32x128xi32>
    %20 = arith.cmpi ne, %18, %19 : vector<32x128xi32>
    %c0_i32_7 = arith.constant 0 : i32
    %21 = vector.broadcast %c0_i32_7 : i32 to vector<32x128xi32>
    %22 = arith.cmpi slt, %18, %21 : vector<32x128xi32>
    %c0_i32_8 = arith.constant 0 : i32
    %23 = arith.cmpi slt, %16, %c0_i32_8 : i32
    %24 = vector.broadcast %23 : i1 to vector<32x128xi1>
    %25 = vector.broadcast %24 : vector<32x128xi1> to vector<32x128xi1>
    %26 = arith.xori %22, %25 : vector<32x128xi1>
    %27 = arith.andi %26, %20 : vector<32x128xi1>
    %28 = vector.broadcast %16 : i32 to vector<32x128xi32>
    %29 = arith.addi %18, %28 : vector<32x128xi32>
    %30 = arith.select %27, %29, %18 : vector<32x128xi1>, vector<32x128xi32>
    %c0_i32_9 = arith.constant 0 : i32
    %31 = vector.broadcast %c0_i32_9 : i32 to vector<32x128xi32>
    %32 = arith.cmpi eq, %30, %31 : vector<32x128xi32>
    %cst_10 = arith.constant 0.000000e+00 : f32
    %33 = vector.broadcast %cst_10 : f32 to vector<32x128xf32>
    %34 = arith.select %32, %33, %12 : vector<32x128xi1>, vector<32x128xf32>
    %c16_i32_11 = arith.constant 16 : i32
    %c0_i32_12 = arith.constant 0 : i32
    %35 = arith.cmpi eq, %c16_i32_11, %c0_i32_12 : i32
    %c1_i32_13 = arith.constant 1 : i32
    %36 = arith.select %35, %c1_i32_13, %c16_i32_11 : i32
    %37 = vector.broadcast %36 : i32 to vector<32x128xi32>
    %38 = arith.remsi %9, %37 : vector<32x128xi32>
    %c0_i32_14 = arith.constant 0 : i32
    %39 = vector.broadcast %c0_i32_14 : i32 to vector<32x128xi32>
    %40 = arith.cmpi ne, %38, %39 : vector<32x128xi32>
    %c0_i32_15 = arith.constant 0 : i32
    %41 = vector.broadcast %c0_i32_15 : i32 to vector<32x128xi32>
    %42 = arith.cmpi slt, %38, %41 : vector<32x128xi32>
    %c0_i32_16 = arith.constant 0 : i32
    %43 = arith.cmpi slt, %36, %c0_i32_16 : i32
    %44 = vector.broadcast %43 : i1 to vector<32x128xi1>
    %45 = vector.broadcast %44 : vector<32x128xi1> to vector<32x128xi1>
    %46 = arith.xori %42, %45 : vector<32x128xi1>
    %47 = arith.andi %46, %40 : vector<32x128xi1>
    %48 = vector.broadcast %36 : i32 to vector<32x128xi32>
    %49 = arith.addi %38, %48 : vector<32x128xi32>
    %50 = arith.select %47, %49, %38 : vector<32x128xi1>, vector<32x128xi32>
    %c15_i32 = arith.constant 15 : i32
    %51 = vector.broadcast %c15_i32 : i32 to vector<32x128xi32>
    %52 = arith.cmpi eq, %50, %51 : vector<32x128xi32>
    %cst_17 = arith.constant 0.000000e+00 : f32
    %53 = vector.broadcast %cst_17 : f32 to vector<32x128xf32>
    %54 = arith.select %52, %53, %14 : vector<32x128xi1>, vector<32x128xf32>
    %55 = arith.truncf %34 : vector<32x128xf32> to vector<32x128xbf16>
    %56 = arith.truncf %8 : vector<32x128xf32> to vector<32x128xbf16>
    %57 = arith.truncf %54 : vector<32x128xf32> to vector<32x128xbf16>
    %58 = tpu.concatenate %55, %56, %57 in 1 : vector<32x128xbf16>, vector<32x128xbf16>, vector<32x128xbf16> -> vector<32x384xbf16>
    %c0_18 = arith.constant 0 : index
    %c0_19 = arith.constant 0 : index
    %59 = vector.load %arg2[%c0_18, %c0_19] : memref<384x128xbf16, #tpu.memory_space<vmem>>, vector<384x128xbf16>
    %cst_20 = arith.constant dense<0.000000e+00> : vector<32x128xf32>
    %60 = tpu.matmul %58, %59, %cst_20 {dimension_numbers = #tpu.dot_dimension_numbers<[1], [0], [0], [1], [0, 0, 1, 1], [], []>} : vector<32x384xbf16>, vector<384x128xbf16>, vector<32x128xf32> -> vector<32x128xf32>
    %c0_21 = arith.constant 0 : index
    %c0_22 = arith.constant 0 : index
    %61 = vector.load %arg5[%c0_21, %c0_22] : memref<32x128xf32, #tpu.memory_space<vmem>>, vector<32x128xf32>
    tpu.vector_store %arg5[%c0_21, %c0_22], %60 {strides = array<i32>} : memref<32x128xf32, #tpu.memory_space<vmem>>, vector<32x128xf32>,
    %cst_23 = arith.constant dense<0.000000e+00> : vector<128xf32>
    %62 = vector.multi_reduction <add>, %60, %cst_23 [0] : vector<32x128xf32> to vector<128xf32>
    %63 = vector.shape_cast %62 : vector<128xf32> to vector<1x128xf32>
    %64 = arith.mulf %60, %60 : vector<32x128xf32>
    %cst_24 = arith.constant dense<0.000000e+00> : vector<128xf32>
    %65 = vector.multi_reduction <add>, %64, %cst_24 [0] : vector<32x128xf32> to vector<128xf32>
    %66 = vector.shape_cast %65 : vector<128xf32> to vector<1x128xf32>
    %67 = tpu.concatenate %63, %66 in 0 : vector<1x128xf32>, vector<1x128xf32> -> vector<2x128xf32>
    %c0_25 = arith.constant 0 : index
    %c0_26 = arith.constant 0 : index
    %c0_27 = arith.constant 0 : index
    %68 = vector.load %arg6[%c0_25, %c0_26, %c0_27] : memref<1x2x128xf32, #tpu.memory_space<vmem>>, vector<1x2x128xf32>
    %69 = vector.shape_cast %68 : vector<1x2x128xf32> to vector<2x128xf32>
    %70 = vector.shape_cast %67 : vector<2x128xf32> to vector<1x2x128xf32>
    tpu.vector_store %arg6[%c0_25, %c0_26, %c0_27], %70 {strides = array<i32>} : memref<1x2x128xf32, #tpu.memory_space<vmem>>, vector<1x2x128xf32>,
    return
  }
  func.func @transform_0(%arg0: i32) -> (i32, i32) {
    %c0_i32 = arith.constant 0 : i32
    %c0_i32_0 = arith.constant 0 : i32
    return %arg0, %c0_i32 : i32, i32
  }
  func.func @transform_1(%arg0: i32) -> (i32, i32) {
    %c0_i32 = arith.constant 0 : i32
    %c0_i32_0 = arith.constant 0 : i32
    %c0_i32_1 = arith.constant 0 : i32
    return %c0_i32, %c0_i32_0 : i32, i32
  }
  func.func @transform_2(%arg0: i32) -> (i32, i32) {
    %c0_i32 = arith.constant 0 : i32
    %c0_i32_0 = arith.constant 0 : i32
    %c0_i32_1 = arith.constant 0 : i32
    return %c0_i32, %c0_i32_0 : i32, i32
  }
  func.func @transform_3(%arg0: i32) -> (i32, i32) {
    %c0_i32 = arith.constant 0 : i32
    %c0_i32_0 = arith.constant 0 : i32
    %c0_i32_1 = arith.constant 0 : i32
    return %c0_i32, %c0_i32_0 : i32, i32
  }
  func.func @transform_4(%arg0: i32) -> (i32, i32) {
    %c0_i32 = arith.constant 0 : i32
    %c0_i32_0 = arith.constant 0 : i32
    return %arg0, %c0_i32 : i32, i32
  }
  func.func @transform_5(%arg0: i32) -> (i32, i32, i32) {
    %c0_i32 = arith.constant 0 : i32
    %c0_i32_0 = arith.constant 0 : i32
    %c0_i32_1 = arith.constant 0 : i32
    return %arg0, %c0_i32, %c0_i32_0 : i32, i32, i32
  }
}

</mosaic_0001>

<llo_original>
// kernel: enc_block.2
$region0: #{enc_block.2}
  #allocation0 [shape = 'u32[]', space=smem, size = 0x4, offset = 0x4, fixed_abs, tag = 'smem constant byte address 0x4 - core index']
  #allocation1 [shape = 'u32[144,128]{1,0:T(1,128)}', space=vmem, size = 0x12000, scoped, tag = 'internal scratch']
  %s0 = inlined_call_operand.vmem [shape: f32[32,128], index: 0, kind: input, shape index: {}]
  %s1 = inlined_call_operand.vmem [shape: bf16[384,128], index: 1, kind: input, shape index: {}]
  %s2 = inlined_call_operand.vmem [shape: f32[32,128], index: 2, kind: output, shape index: {0}]
  %s3 = inlined_call_operand.vmem [shape: f32[1,2,128], index: 3, kind: output, shape index: {1}]
  %4 = xla_tuple %s2, %s3
  %s5 = sld [smem:[#allocation0]]
  $region26: #{enc_block.2} parent=0
    _
  %s7 = ssub.s32 1, %s5
  %s8 = scalar_select 0, %s7, %s5
  // Predicated region
  $region2: #{enc_block.2} parent=0 // pred_check
    _
  $region3: #{enc_block.2} parent=0 // pred_check_branch
    %10 = sbr.rel (0) target = $region5
  $region4: #{enc_block.2} parent=0 // pred_region
    _
  $region5: #{enc_block.2} parent=0 // pred_fallthru
    _
  // Predicated region
  $region6: #{enc_block.2} parent=0 // pred_check
    _
  $region7: #{enc_block.2} parent=0 // pred_check_branch
    %12 = sbr.rel (0) target = $region9
  $region8: #{enc_block.2} parent=0 // pred_region
    _
  $region9: #{enc_block.2} parent=0 // pred_fallthru
    _
  %v14 = vld [vmem:[%s0] sm:$0xff]
  %v15 = vld [vmem:[%s0 + $0x8] sm:$0xff]
  %v16 = vld [vmem:[%s0 + $0x10] sm:$0xff]
  %v17 = vld [vmem:[%s0 + $0x18] sm:$0xff]
  %v18 = vlaneseq
  %v19 = vshrl.u32 %v18, 7
  %v20 = vadd.s32 %v19, 8
  %v21 = vadd.s32 %v19, 16
  %v22 = vadd.s32 %v19, 24
  %vm27 = vcmask 1040384
  %v28 = vrot.slane %v14, 7
  %v29 = vrot.slane %v15, 7
  %v30 = vsel %vm27, %v28, %v29
  %v31 = vrot.slane %v16, 7
  %v32 = vsel %vm27, %v29, %v31
  %v33 = vrot.slane %v17, 7
  %v34 = vsel %vm27, %v31, %v33
  %v39 = vsel %vm27, 0.0, %v28
  %vm40 = vcmask 1046528
  %v41 = vrot.slane %v14, 1
  %v42 = vrot.slane %v15, 1
  %v43 = vsel %vm40, %v41, %v42
  %v44 = vrot.slane %v16, 1
  %v45 = vsel %vm40, %v42, %v44
  %v46 = vrot.slane %v17, 1
  %v47 = vsel %vm40, %v44, %v46
  %v52 = vsel %vm40, %v46, 0.0
  %vm53 = vcmp.lt.s32.totalorder %v19, 0
  %v54 = vsub.s32 0, %v19
  %v55 = vsel %vm53, %v54, %v19
  %v56 = vshrl.u32 %v55, 4
  %v57 = vand.u32 %v55, 15
  %v58 = vsub.s32 0, %v57
  %v59 = vsel %vm53, %v58, %v57
  %vm60 = vcmp.lt.s32.totalorder %v20, 0
  %v61 = vsub.s32 0, %v20
  %v62 = vsel %vm60, %v61, %v20
  %v63 = vshrl.u32 %v62, 4
  %v64 = vand.u32 %v62, 15
  %v65 = vsub.s32 0, %v64
  %v66 = vsel %vm60, %v65, %v64
  %vm67 = vcmp.lt.s32.totalorder %v21, 0
  %v68 = vsub.s32 0, %v21
  %v69 = vsel %vm67, %v68, %v21
  %v70 = vshrl.u32 %v69, 4
  %v71 = vand.u32 %v69, 15
  %v72 = vsub.s32 0, %v71
  %v73 = vsel %vm67, %v72, %v71
  %vm74 = vcmp.lt.s32.totalorder %v22, 0
  %v75 = vsub.s32 0, %v22
  %v76 = vsel %vm74, %v75, %v22
  %v77 = vshrl.u32 %v76, 4
  %v78 = vand.u32 %v76, 15
  %v79 = vsub.s32 0, %v78
  %v80 = vsel %vm74, %v79, %v78
  %vm81 = vcmp.ne.s32.totalorder %v59, 0
  %vm82 = vcmp.ne.s32.totalorder %v66, 0
  %vm83 = vcmp.ne.s32.totalorder %v73, 0
  %vm84 = vcmp.ne.s32.totalorder %v80, 0
  %vm85 = vcmp.lt.s32.totalorder %v59, 0
  %vm86 = vcmp.lt.s32.totalorder %v66, 0
  %vm87 = vcmp.lt.s32.totalorder %v73, 0
  %vm88 = vcmp.lt.s32.totalorder %v80, 0
  %vm89 = vmand %vm85, %vm81
  %vm90 = vmand %vm86, %vm82
  %vm91 = vmand %vm87, %vm83
  %vm92 = vmand %vm88, %vm84
  %v93 = vadd.s32 %v59, 16
  %v94 = vadd.s32 %v66, 16
  %v95 = vadd.s32 %v73, 16
  %v96 = vadd.s32 %v80, 16
  %v97 = vsel %vm89, %v93, %v59
  %v98 = vsel %vm90, %v94, %v66
  %v99 = vsel %vm91, %v95, %v73
  %v100 = vsel %vm92, %v96, %v80
  %vm101 = vcmp.eq.s32.totalorder %v97, 0
  %vm102 = vcmp.eq.s32.totalorder %v98, 0
  %vm103 = vcmp.eq.s32.totalorder %v99, 0
  %vm104 = vcmp.eq.s32.totalorder %v100, 0
  %v105 = vsel %vm101, 0.0, %v39
  %v106 = vsel %vm102, 0.0, %v30
  %v107 = vsel %vm103, 0.0, %v32
  %v108 = vsel %vm104, 0.0, %v34
  %vm109 = vcmp.eq.s32.totalorder %v97, 15
  %vm110 = vcmp.eq.s32.totalorder %v98, 15
  %vm111 = vcmp.eq.s32.totalorder %v99, 15
  %vm112 = vcmp.eq.s32.totalorder %v100, 15
  %v113 = vsel %vm109, 0.0, %v43
  %v114 = vsel %vm110, 0.0, %v45
  %v115 = vsel %vm111, 0.0, %v47
  %v116 = vsel %vm112, 0.0, %v52
  %v117 = vpack.c.bf16 %v106, %v105
  %v118 = vpack.c.bf16 %v108, %v107
  %v119 = vpack.c.bf16 %v15, %v14
  %v120 = vpack.c.bf16 %v17, %v16
  %v121 = vpack.c.bf16 %v114, %v113
  %v122 = vpack.c.bf16 %v116, %v115
  %v123 = vld [vmem:[%s1] sm:$0xf]
  %v124 = vld [vmem:[%s1 + $0x4] sm:$0xf]
  %v125 = vld [vmem:[%s1 + $0x8] sm:$0xf]
  %v126 = vld [vmem:[%s1 + $0xc] sm:$0xf]
  %v127 = vld [vmem:[%s1 + $0x10] sm:$0xf]
  %v128 = vld [vmem:[%s1 + $0x14] sm:$0xf]
  %v129 = vld [vmem:[%s1 + $0x18] sm:$0xf]
  %v130 = vld [vmem:[%s1 + $0x1c] sm:$0xf]
  %v131 = vld [vmem:[%s1 + $0x20] sm:$0xf]
  %v132 = vld [vmem:[%s1 + $0x24] sm:$0xf]
  %v133 = vld [vmem:[%s1 + $0x28] sm:$0xf]
  %v134 = vld [vmem:[%s1 + $0x2c] sm:$0xf]
  %v135 = vld [vmem:[%s1 + $0x30] sm:$0xf]
  %v136 = vld [vmem:[%s1 + $0x34] sm:$0xf]
  %v137 = vld [vmem:[%s1 + $0x38] sm:$0xf]
  %v138 = vld [vmem:[%s1 + $0x3c] sm:$0xf]
  %v139 = vld [vmem:[%s1 + $0x40] sm:$0xf]
  %v140 = vld [vmem:[%s1 + $0x44] sm:$0xf]
  %v141 = vld [vmem:[%s1 + $0x48] sm:$0xf]
  %v142 = vld [vmem:[%s1 + $0x4c] sm:$0xf]
  %v143 = vld [vmem:[%s1 + $0x50] sm:$0xf]
  %v144 = vld [vmem:[%s1 + $0x54] sm:$0xf]
  %v145 = vld [vmem:[%s1 + $0x58] sm:$0xf]
  %v146 = vld [vmem:[%s1 + $0x5c] sm:$0xf]
  %v147 = vld [vmem:[%s1 + $0x60] sm:$0xf]
  %v148 = vld [vmem:[%s1 + $0x64] sm:$0xf]
  %v149 = vld [vmem:[%s1 + $0x68] sm:$0xf]
  %v150 = vld [vmem:[%s1 + $0x6c] sm:$0xf]
  %v151 = vld [vmem:[%s1 + $0x70] sm:$0xf]
  %v152 = vld [vmem:[%s1 + $0x74] sm:$0xf]
  %v153 = vld [vmem:[%s1 + $0x78] sm:$0xf]
  %v154 = vld [vmem:[%s1 + $0x7c] sm:$0xf]
  %v155 = vld [vmem:[%s1 + $0x80] sm:$0xf]
  %v156 = vld [vmem:[%s1 + $0x84] sm:$0xf]
  %v157 = vld [vmem:[%s1 + $0x88] sm:$0xf]
  %v158 = vld [vmem:[%s1 + $0x8c] sm:$0xf]
  %v159 = vld [vmem:[%s1 + $0x90] sm:$0xf]
  %v160 = vld [vmem:[%s1 + $0x94] sm:$0xf]
  %v161 = vld [vmem:[%s1 + $0x98] sm:$0xf]
  %v162 = vld [vmem:[%s1 + $0x9c] sm:$0xf]
  %v163 = vld [vmem:[%s1 + $0xa0] sm:$0xf]
  %v164 = vld [vmem:[%s1 + $0xa4] sm:$0xf]
  %v165 = vld [vmem:[%s1 + $0xa8] sm:$0xf]
  %v166 = vld [vmem:[%s1 + $0xac] sm:$0xf]
  %v167 = vld [vmem:[%s1 + $0xb0] sm:$0xf]
  %v168 = vld [vmem:[%s1 + $0xb4] sm:$0xf]
  %v169 = vld [vmem:[%s1 + $0xb8] sm:$0xf]
  %v170 = vld [vmem:[%s1 + $0xbc] sm:$0xf]
  %v219 = vunpack.c.l.b16 %v123
  %v220 = vunpack.c.l.b16 %v124
  %v221 = vunpack.c.l.b16 %v125
  %v222 = vunpack.c.l.b16 %v126
  %v223 = vunpack.c.l.b16 %v127
  %v224 = vunpack.c.l.b16 %v128
  %v225 = vunpack.c.l.b16 %v129
  %v226 = vunpack.c.l.b16 %v130
  %v227 = vunpack.c.l.b16 %v131
  %v228 = vunpack.c.l.b16 %v132
  %v229 = vunpack.c.l.b16 %v133
  %v230 = vunpack.c.l.b16 %v134
  %v231 = vunpack.c.l.b16 %v135
  %v232 = vunpack.c.l.b16 %v136
  %v233 = vunpack.c.l.b16 %v137
  %v234 = vunpack.c.l.b16 %v138
  %v235 = vunpack.c.l.b16 %v139
  %v236 = vunpack.c.l.b16 %v140
  %v237 = vunpack.c.l.b16 %v141
  %v238 = vunpack.c.l.b16 %v142
  %v239 = vunpack.c.l.b16 %v143
  %v240 = vunpack.c.l.b16 %v144
  %v241 = vunpack.c.l.b16 %v145
  %v242 = vunpack.c.l.b16 %v146
  %v243 = vunpack.c.l.b16 %v147
  %v244 = vunpack.c.l.b16 %v148
  %v245 = vunpack.c.l.b16 %v149
  %v246 = vunpack.c.l.b16 %v150
  %v247 = vunpack.c.l.b16 %v151
  %v248 = vunpack.c.l.b16 %v152
  %v249 = vunpack.c.l.b16 %v153
  %v250 = vunpack.c.l.b16 %v154
  %v251 = vunpack.c.l.b16 %v155
  %v252 = vunpack.c.l.b16 %v156
  %v253 = vunpack.c.l.b16 %v157
  %v254 = vunpack.c.l.b16 %v158
  %v255 = vunpack.c.l.b16 %v159
  %v256 = vunpack.c.l.b16 %v160
  %v257 = vunpack.c.l.b16 %v161
  %v258 = vunpack.c.l.b16 %v162
  %v259 = vunpack.c.l.b16 %v163
  %v260 = vunpack.c.l.b16 %v164
  %v261 = vunpack.c.l.b16 %v165
  %v262 = vunpack.c.l.b16 %v166
  %v263 = vunpack.c.l.b16 %v167
  %v264 = vunpack.c.l.b16 %v168
  %v265 = vunpack.c.l.b16 %v169
  %v266 = vunpack.c.l.b16 %v170
  %v267 = vpack.c.b16 %v220, %v219
  %v268 = vpack.c.b16 %v222, %v221
  %v269 = vpack.c.b16 %v224, %v223
  %v270 = vpack.c.b16 %v226, %v225
  %v271 = vpack.c.b16 %v228, %v227
  %v272 = vpack.c.b16 %v230, %v229
  %v273 = vpack.c.b16 %v232, %v231
  %v274 = vpack.c.b16 %v234, %v233
  %v275 = vpack.c.b16 %v236, %v235
  %v276 = vpack.c.b16 %v238, %v237
  %v277 = vpack.c.b16 %v240, %v239
  %v278 = vpack.c.b16 %v242, %v241
  %v279 = vpack.c.b16 %v244, %v243
  %v280 = vpack.c.b16 %v246, %v245
  %v281 = vpack.c.b16 %v248, %v247
  %v282 = vpack.c.b16 %v250, %v249
  %v283 = vpack.c.b16 %v252, %v251
  %v284 = vpack.c.b16 %v254, %v253
  %v285 = vpack.c.b16 %v256, %v255
  %v286 = vpack.c.b16 %v258, %v257
  %v287 = vpack.c.b16 %v260, %v259
  %v288 = vpack.c.b16 %v262, %v261
  %v289 = vpack.c.b16 %v264, %v263
  %v290 = vpack.c.b16 %v266, %v265
  %315 = vmatprep.subr.bf16.mxu0 0
  %316 = vmatpush1.bf16.msra.mxu0 %v267
  %317 = vmatprep.subr.bf16.mxu0 0
  %318 = vmatpush1.bf16.msra.mxu0 %v268
  %319 = vmatprep.subr.bf16.mxu0 0
  %320 = vmatpush1.bf16.msra.mxu0 %v269
  %321 = vmatprep.subr.bf16.mxu0 0
  %322 = vmatpush1.bf16.msra.mxu0 %v270
  %323 = vmatprep.subr.bf16.mxu0 0
  %324 = vmatpush1.bf16.msra.mxu0 %v271
  %325 = vmatprep.subr.bf16.mxu0 0
  %326 = vmatpush1.bf16.msra.mxu0 %v272
  %327 = vmatprep.subr.bf16.mxu0 0
  %328 = vmatpush1.bf16.msra.mxu0 %v273
  %329 = vmatprep.subr.bf16.mxu0 0
  %330 = vmatpush1.bf16.msra.mxu0 %v274
  %331 = vmatprep.subr.bf16.mxu0 0
  %332 = vmatpush1.bf16.msra.mxu0 %v275
  %333 = vmatprep.subr.bf16.mxu0 0
  %334 = vmatpush1.bf16.msra.mxu0 %v276
  %335 = vmatprep.subr.bf16.mxu0 0
  %336 = vmatpush1.bf16.msra.mxu0 %v277
  %337 = vmatprep.subr.bf16.mxu0 0
  %338 = vmatpush1.bf16.msra.mxu0 %v278
  %339 = vmatprep.subr.bf16.mxu0 0
  %340 = vmatpush1.bf16.msra.mxu0 %v279
  %341 = vmatprep.subr.bf16.mxu0 0
  %342 = vmatpush1.bf16.msra.mxu0 %v280
  %343 = vmatprep.subr.bf16.mxu0 0
  %344 = vmatpush1.bf16.msra.mxu0 %v281
  %345 = vmatprep.subr.bf16.mxu0 0
  %346 = vmatpush1.bf16.msra.mxu0 %v282
  %347 = vmatprep.mubr.bf16.mxu0 %v119
  %348 = vmatmul.mubr.bf16.gmra.mrb[0].mxu0 %v117
  %v349 = vpop.f32.mrb[0].mxu0
  %v350 = vadd.f32 0.0, %v349
  %v351 = vpop.f32.mrb[0].mxu0
  %v352 = vpop.f32.mrb[0].mxu0
  %v353 = vadd.f32 0.0, %v352
  %v354 = vpop.f32.mrb[0].mxu0
  %355 = vmatprep.mubr.bf16.mxu0 %v120
  %356 = vmatmul.mubr.bf16.gmra.mrb[0].mxu0 %v118
  %v357 = vpop.f32.mrb[0].mxu0
  %v358 = vadd.f32 0.0, %v357
  %v359 = vpop.f32.mrb[0].mxu0
  %v360 = vpop.f32.mrb[0].mxu0
  %v361 = vadd.f32 0.0, %v360
  %v362 = vpop.f32.mrb[0].mxu0
  %363 = vdwg.mxu0
  %364 = vmatprep.subr.bf16.mxu0 0
  %365 = vmatpush1.bf16.msra.mxu0 %v283
  %366 = vmatprep.subr.bf16.mxu0 0
  %367 = vmatpush1.bf16.msra.mxu0 %v284
  %368 = vmatprep.subr.bf16.mxu0 0
  %369 = vmatpush1.bf16.msra.mxu0 %v285
  %370 = vmatprep.subr.bf16.mxu0 0
  %371 = vmatpush1.bf16.msra.mxu0 %v286
  %372 = vmatprep.subr.bf16.mxu0 0
  %373 = vmatpush1.bf16.msra.mxu0 %v287
  %374 = vmatprep.subr.bf16.mxu0 0
  %375 = vmatpush1.bf16.msra.mxu0 %v288
  %376 = vmatprep.subr.bf16.mxu0 0
  %377 = vmatpush1.bf16.msra.mxu0 %v289
  %378 = vmatprep.subr.bf16.mxu0 0
  %379 = vmatpush1.bf16.msra.mxu0 %v290
  %380 = vmatprep.subr.bf16.mxu0 0
  %381 = vmatpush1.bf16.msra.mxu0 0
  %382 = vmatprep.subr.bf16.mxu0 0
  %383 = vmatpush1.bf16.msra.mxu0 0
  %384 = vmatprep.subr.bf16.mxu0 0
  %385 = vmatpush1.bf16.msra.mxu0 0
  %386 = vmatprep.subr.bf16.mxu0 0
  %387 = vmatpush1.bf16.msra.mxu0 0
  %388 = vmatprep.subr.bf16.mxu0 0
  %389 = vmatpush1.bf16.msra.mxu0 0
  %390 = vmatprep.subr.bf16.mxu0 0
  %391 = vmatpush1.bf16.msra.mxu0 0
  %392 = vmatprep.subr.bf16.mxu0 0
  %393 = vmatpush1.bf16.msra.mxu0 0
  %394 = vmatprep.subr.bf16.mxu0 0
  %395 = vmatpush1.bf16.msra.mxu0 0
  %396 = vmatprep.mubr.bf16.mxu0 0
  %397 = vmatmul.mubr.bf16.gmra.mrb[0].mxu0 %v121
  %v398 = vpop.f32.mrb[0].mxu0
  %v399 = vadd.f32 %v350, %v398
  %v400 = vpop.f32.mrb[0].mxu0
  %v401 = vpop.f32.mrb[0].mxu0
  %v402 = vadd.f32 %v353, %v401
  %v403 = vpop.f32.mrb[0].mxu0
  %404 = vmatprep.mubr.bf16.mxu0 0
  %405 = vmatmul.mubr.bf16.gmra.mrb[0].mxu0 %v122
  %v406 = vpop.f32.mrb[0].mxu0
  %v407 = vadd.f32 %v358, %v406
  %v408 = vpop.f32.mrb[0].mxu0
  %v409 = vpop.f32.mrb[0].mxu0
  %v410 = vadd.f32 %v361, %v409
  %v411 = vpop.f32.mrb[0].mxu0
  %412 = vdwg.mxu0
  %413 = vst [vmem:[%s2] sm:$0xff] %v399
  %414 = vst [vmem:[%s2 + $0x8] sm:$0xff] %v402
  %415 = vst [vmem:[%s2 + $0x10] sm:$0xff] %v407
  %416 = vst [vmem:[%s2 + $0x18] sm:$0xff] %v410
  %v417 = vadd.f32 %v399, %v402
  %v418 = vadd.f32 %v417, %v407
  %v419 = vadd.f32 %v418, %v410
  %v420 = vrot.slane %v419, 4
  %v421 = vadd.f32 %v419, %v420
  %v422 = vrot.slane %v421, 2
  %v423 = vadd.f32 %v421, %v422
  %v424 = vrot.slane %v423, 1
  %v425 = vadd.f32 %v423, %v424
  %v426 = vmul.f32 %v399, %v399
  %v427 = vmul.f32 %v402, %v402
  %v428 = vmul.f32 %v407, %v407
  %v429 = vmul.f32 %v410, %v410
  %v430 = vadd.f32 %v426, %v427
  %v431 = vadd.f32 %v430, %v428
  %v432 = vadd.f32 %v431, %v429
  %v433 = vrot.slane %v432, 4
  %v434 = vadd.f32 %v432, %v433
  %v435 = vrot.slane %v434, 2
  %v436 = vadd.f32 %v434, %v435
  %v437 = vrot.slane %v436, 1
  %v438 = vadd.f32 %v436, %v437
  %v439 = vsel %vm27, %v425, %v438
  %440 = vst [vmem:[%s3] sm:$0x3] %v439
  // Predicated region
  $region10: #{enc_block.2} parent=0 // pred_check
    _
  $region11: #{enc_block.2} parent=0 // pred_check_branch
    %442 = sbr.rel (0) target = $region13
  $region12: #{enc_block.2} parent=0 // pred_region
    _
  $region13: #{enc_block.2} parent=0 // pred_fallthru
    _
  // Predicated region
  $region14: #{enc_block.2} parent=0 // pred_check
    _
  $region15: #{enc_block.2} parent=0 // pred_check_branch
    %444 = sbr.rel (0) target = $region17
  $region16: #{enc_block.2} parent=0 // pred_region
    _
  $region17: #{enc_block.2} parent=0 // pred_fallthru
    _
  // Predicated region
  $region18: #{enc_block.2} parent=0 // pred_check
    _
  $region19: #{enc_block.2} parent=0 // pred_check_branch
    %446 = sbr.rel (0) target = $region21
  $region20: #{enc_block.2} parent=0 // pred_region
    _
  $region21: #{enc_block.2} parent=0 // pred_fallthru
    _
  // Predicated region
  $region22: #{enc_block.2} parent=0 // pred_check
    _
  $region23: #{enc_block.2} parent=0 // pred_check_branch
    %448 = sbr.rel (0) target = $region25
  $region24: #{enc_block.2} parent=0 // pred_region
    _
  $region25: #{enc_block.2} parent=0 // pred_fallthru
    _

// kernel: squeeze.16
$region0: #{squeeze.16}
  %s0 = inlined_call_operand.vmem [shape: f32[128], index: 0, kind: input, shape index: {}]
  %s1 = inlined_call_operand.vmem [shape: f32[16,8], index: 1, kind: output, shape index: {}]
  $region1: #{squeeze.16} parent=0
    #allocation0 [shape = 'u8[4096]{0}', space=vmem, size = 0x1000, scoped, tag = 'scoped mem for input reshape']
    %s3 = sshllo.u32 0, 1
    %v4 = vld [vmem:[%s0] sm:%s3]
    %5 = vst [vmem:[#allocation0] sm:%s3] %v4
    %v6 = vld [vmem:[#allocation0] sm:$0x1]
    %vm7 = vcmask 64512
    %8 = vst.msk [vmem:[%s1] sm:$0x1] %vm7, %v6
    %v9 = vld [vmem:[#allocation0] sm:$0x1]
    %10 = vrot.lane.b32.xlu0 %v9, 120
    %v11 = vpop.permute.xlu0 %10
    %vm12 = vcmask 64512
    %s13 = scalar_lea.vmem %s1, 1
    %14 = vst.msk [vmem:[%s13] sm:$0x1] %vm12, %v11
    %v15 = vld [vmem:[#allocation0] sm:$0x1]
    %16 = vrot.lane.b32.xlu0 %v15, 112
    %v17 = vpop.permute.xlu0 %16
    %vm18 = vcmask 64512
    %s19 = scalar_lea.vmem %s1, 2
    %20 = vst.msk [vmem:[%s19] sm:$0x1] %vm18, %v17
    %v21 = vld [vmem:[#allocation0] sm:$0x1]
    %22 = vrot.lane.b32.xlu0 %v21, 104
    %v23 = vpop.permute.xlu0 %22
    %vm24 = vcmask 64512
    %s25 = scalar_lea.vmem %s1, 3
    %26 = vst.msk [vmem:[%s25] sm:$0x1] %vm24, %v23
    %v27 = vld [vmem:[#allocation0] sm:$0x1]
    %28 = vrot.lane.b32.xlu0 %v27, 96
    %v29 = vpop.permute.xlu0 %28
    %vm30 = vcmask 64512
    %s31 = scalar_lea.vmem %s1, 4
    %32 = vst.msk [vmem:[%s31] sm:$0x1] %vm30, %v29
    %v33 = vld [vmem:[#allocation0] sm:$0x1]
    %34 = vrot.lane.b32.xlu0 %v33, 88
    %v35 = vpop.permute.xlu0 %34
    %vm36 = vcmask 64512
    %s37 = scalar_lea.vmem %s1, 5
    %38 = vst.msk [vmem:[%s37] sm:$0x1] %vm36, %v35
    %v39 = vld [vmem:[#allocation0] sm:$0x1]
    %40 = vrot.lane.b32.xlu0 %v39, 80
    %v41 = vpop.permute.xlu0 %40
    %vm42 = vcmask 64512
    %s43 = scalar_lea.vmem %s1, 6
    %44 = vst.msk [vmem:[%s43] sm:$0x1] %vm42, %v41
    %v45 = vld [vmem:[#allocation0] sm:$0x1]
    %46 = vrot.lane.b32.xlu0 %v45, 72
    %v47 = vpop.permute.xlu0 %46
    %vm48 = vcmask 64512
    %s49 = scalar_lea.vmem %s1, 7
    %50 = vst.msk [vmem:[%s49] sm:$0x1] %vm48, %v47
    %v51 = vld [vmem:[#allocation0] sm:$0x1]
    %52 = vrot.lane.b32.xlu0 %v51, 64
    %v53 = vpop.permute.xlu0 %52
    %vm54 = vcmask 64512
    %s55 = scalar_lea.vmem %s1, 8
    %56 = vst.msk [vmem:[%s55] sm:$0x1] %vm54, %v53
    %v57 = vld [vmem:[#allocation0] sm:$0x1]
    %58 = vrot.lane.b32.xlu0 %v57, 56
    %v59 = vpop.permute.xlu0 %58
    %vm60 = vcmask 64512
    %s61 = scalar_lea.vmem %s1, 9
    %62 = vst.msk [vmem:[%s61] sm:$0x1] %vm60, %v59
    %v63 = vld [vmem:[#allocation0] sm:$0x1]
    %64 = vrot.lane.b32.xlu0 %v63, 48
    %v65 = vpop.permute.xlu0 %64
    %vm66 = vcmask 64512
    %s67 = scalar_lea.vmem %s1, 10
    %68 = vst.msk [vmem:[%s67] sm:$0x1] %vm66, %v65
    %v69 = vld [vmem:[#allocation0] sm:$0x1]
    %70 = vrot.lane.b32.xlu0 %v69, 40
    %v71 = vpop.permute.xlu0 %70
    %vm72 = vcmask 64512
    %s73 = scalar_lea.vmem %s1, 11
    %74 = vst.msk [vmem:[%s73] sm:$0x1] %vm72, %v71
    %v75 = vld [vmem:[#allocation0] sm:$0x1]
    %76 = vrot.lane.b32.xlu0 %v75, 32
    %v77 = vpop.permute.xlu0 %76
    %vm78 = vcmask 64512
    %s79 = scalar_lea.vmem %s1, 12
    %80 = vst.msk [vmem:[%s79] sm:$0x1] %vm78, %v77
    %v81 = vld [vmem:[#allocation0] sm:$0x1]
    %82 = vrot.lane.b32.xlu0 %v81, 24
    %v83 = vpop.permute.xlu0 %82
    %vm84 = vcmask 64512
    %s85 = scalar_lea.vmem %s1, 13
    %86 = vst.msk [vmem:[%s85] sm:$0x1] %vm84, %v83
    %v87 = vld [vmem:[#allocation0] sm:$0x1]
    %88 = vrot.lane.b32.xlu0 %v87, 16
    %v89 = vpop.permute.xlu0 %88
    %vm90 = vcmask 64512
    %s91 = scalar_lea.vmem %s1, 14
    %92 = vst.msk [vmem:[%s91] sm:$0x1] %vm90, %v89
    %v93 = vld [vmem:[#allocation0] sm:$0x1]
    %94 = vrot.lane.b32.xlu0 %v93, 8
    %v95 = vpop.permute.xlu0 %94
    %vm96 = vcmask 64512
    %s97 = scalar_lea.vmem %s1, 15
    %98 = vst.msk [vmem:[%s97] sm:$0x1] %vm96, %v95

// kernel: tile.23
$region0: #{tile.23}
  #allocation0 [shape = 's32[1]{0}', space=sflag, size = 0x4, scoped, tag = 'scoped memory for tile.23']
  %s0 = inlined_call_operand.vmem [shape: f32[8], index: 0, kind: input, shape index: {}]
  %s1 = inlined_call_operand.vmem [shape: f32[16,8], index: 1, kind: output, shape index: {}]
  // Predicated region
  $region2: #{tile.23} parent=0 // pred_check
    _
  $region3: #{tile.23} parent=0 // pred_check_branch
    %3 = sbr.rel (0) target = $region5
  $region4: #{tile.23} parent=0 // pred_region
    _
  $region5: #{tile.23} parent=0 // pred_fallthru
    _
  %v4 = vld [vmem:[%s0] ss:$0 sm:$0xff]
  %5 = vst [vmem:[%s1] sm:$0xff] %v4
  %s6 = scalar_lea.vmem %s1, 8
  %7 = vst [vmem:[%s6] sm:$0xff] %v4

// kernel: tile.28
$region0: #{tile.28}
  %s0 = inlined_call_operand.vmem [shape: f32[16,8], index: 0, kind: input, shape index: {}]
  %s1 = inlined_call_operand.vmem [shape: f32[1,128], index: 1, kind: output, shape index: {}]
  $region1: #{tile.28} parent=0
    #allocation0 [shape = 'u8[4096]{0}', space=vmem, size = 0x1000, scoped, tag = 'scoped mem for output reshape']
    %v2 = vld [vmem:[%s0] sm:$0x1]
    %vm3 = vcmask 64512
    %4 = vst.msk [vmem:[#allocation0] sm:$0x1] %vm3, %v2
    %s5 = scalar_lea.vmem %s0, 15
    %v6 = vld [vmem:[%s5] sm:$0x1]
    %7 = vrot.lane.b32.xlu0 %v6, 120
    %v8 = vpop.permute.xlu0 %7
    %vm9 = vcmask 1048512
    %10 = vst.msk [vmem:[#allocation0] sm:$0x1] %vm9, %v8
    %s11 = scalar_lea.vmem %s0, 14
    %v12 = vld [vmem:[%s11] sm:$0x1]
    %13 = vrot.lane.b32.xlu0 %v12, 112
    %v14 = vpop.permute.xlu0 %13
    %vm15 = vcmask 982912
    %16 = vst.msk [vmem:[#allocation0] sm:$0x1] %vm15, %v14
    %s17 = scalar_lea.vmem %s0, 13
    %v18 = vld [vmem:[%s17] sm:$0x1]
    %19 = vrot.lane.b32.xlu0 %v18, 104
    %v20 = vpop.permute.xlu0 %19
    %vm21 = vcmask 917312
    %22 = vst.msk [vmem:[#allocation0] sm:$0x1] %vm21, %v20
    %s23 = scalar_lea.vmem %s0, 12
    %v24 = vld [vmem:[%s23] sm:$0x1]
    %25 = vrot.lane.b32.xlu0 %v24, 96
    %v26 = vpop.permute.xlu0 %25
    %vm27 = vcmask 851712
    %28 = vst.msk [vmem:[#allocation0] sm:$0x1] %vm27, %v26
    %s29 = scalar_lea.vmem %s0, 11
    %v30 = vld [vmem:[%s29] sm:$0x1]
    %31 = vrot.lane.b32.xlu0 %v30, 88
    %v32 = vpop.permute.xlu0 %31
    %vm33 = vcmask 786112
    %34 = vst.msk [vmem:[#allocation0] sm:$0x1] %vm33, %v32
    %s35 = scalar_lea.vmem %s0, 10
    %v36 = vld [vmem:[%s35] sm:$0x1]
    %37 = vrot.lane.b32.xlu0 %v36, 80
    %v38 = vpop.permute.xlu0 %37
    %vm39 = vcmask 720512
    %40 = vst.msk [vmem:[#allocation0] sm:$0x1] %vm39, %v38
    %s41 = scalar_lea.vmem %s0, 9
    %v42 = vld [vmem:[%s41] sm:$0x1]
    %43 = vrot.lane.b32.xlu0 %v42, 72
    %v44 = vpop.permute.xlu0 %43
    %vm45 = vcmask 654912
    %46 = vst.msk [vmem:[#allocation0] sm:$0x1] %vm45, %v44
    %s47 = scalar_lea.vmem %s0, 8
    %v48 = vld [vmem:[%s47] sm:$0x1]
    %49 = vrot.lane.b32.xlu0 %v48, 64
    %v50 = vpop.permute.xlu0 %49
    %vm51 = vcmask 589312
    %52 = vst.msk [vmem:[#allocation0] sm:$0x1] %vm51, %v50
    %s53 = scalar_lea.vmem %s0, 7
    %v54 = vld [vmem:[%s53] sm:$0x1]
    %55 = vrot.lane.b32.xlu0 %v54, 56
    %v56 = vpop.permute.xlu0 %55
    %vm57 = vcmask 523712
    %58 = vst.msk [vmem:[#allocation0] sm:$0x1] %vm57, %v56
    %s59 = scalar_lea.vmem %s0, 6
    %v60 = vld [vmem:[%s59] sm:$0x1]
    %61 = vrot.lane.b32.xlu0 %v60, 48
    %v62 = vpop.permute.xlu0 %61
    %vm63 = vcmask 458112
    %64 = vst.msk [vmem:[#allocation0] sm:$0x1] %vm63, %v62
    %s65 = scalar_lea.vmem %s0, 5
    %v66 = vld [vmem:[%s65] sm:$0x1]
    %67 = vrot.lane.b32.xlu0 %v66, 40
    %v68 = vpop.permute.xlu0 %67
    %vm69 = vcmask 392512
    %70 = vst.msk [vmem:[#allocation0] sm:$0x1] %vm69, %v68
    %s71 = scalar_lea.vmem %s0, 4
    %v72 = vld [vmem:[%s71] sm:$0x1]
    %73 = vrot.lane.b32.xlu0 %v72, 32
    %v74 = vpop.permute.xlu0 %73
    %vm75 = vcmask 326912
    %76 = vst.msk [vmem:[#allocation0] sm:$0x1] %vm75, %v74
    %s77 = scalar_lea.vmem %s0, 3
    %v78 = vld [vmem:[%s77] sm:$0x1]
    %79 = vrot.lane.b32.xlu0 %v78, 24
    %v80 = vpop.permute.xlu0 %79
    %vm81 = vcmask 261312
    %82 = vst.msk [vmem:[#allocation0] sm:$0x1] %vm81, %v80
    %s83 = scalar_lea.vmem %s0, 2
    %v84 = vld [vmem:[%s83] sm:$0x1]
    %85 = vrot.lane.b32.xlu0 %v84, 16
    %v86 = vpop.permute.xlu0 %85
    %vm87 = vcmask 195712
    %88 = vst.msk [vmem:[#allocation0] sm:$0x1] %vm87, %v86
    %s89 = scalar_lea.vmem %s0, 1
    %v90 = vld [vmem:[%s89] sm:$0x1]
    %91 = vrot.lane.b32.xlu0 %v90, 8
    %v92 = vpop.permute.xlu0 %91
    %vm93 = vcmask 130112
    %94 = vst.msk [vmem:[#allocation0] sm:$0x1] %vm93, %v92
    %s96 = sshllo.u32 0, 1
    %v98 = vld [vmem:[#allocation0] sm:%s96]
    %s99 = sshllo.u32 0, 1
    %100 = vst [vmem:[%s1] sm:%s99] %v98

// kernel: enc_block.3
$region0: #{enc_block.3}
  #allocation0 [shape = 'u32[]', space=smem, size = 0x4, offset = 0x4, fixed_abs, tag = 'smem constant byte address 0x4 - core index']
  #allocation1 [shape = 'u32[144,128]{1,0:T(1,128)}', space=vmem, size = 0x12000, scoped, tag = 'internal scratch']
  %s0 = inlined_call_operand.vmem [shape: f32[32,128], index: 0, kind: input, shape index: {}]
  %s1 = inlined_call_operand.vmem [shape: bf16[384,128], index: 1, kind: input, shape index: {}]
  %s2 = inlined_call_operand.vmem [shape: f32[1,128], index: 2, kind: input, shape index: {}]
  %s3 = inlined_call_operand.vmem [shape: f32[1,128], index: 3, kind: input, shape index: {}]
  %s4 = inlined_call_operand.vmem [shape: f32[32,128], index: 4, kind: output, shape index: {0}]
  %s5 = inlined_call_operand.vmem [shape: f32[1,2,128], index: 5, kind: output, shape index: {1}]
  %6 = xla_tuple %s4, %s5
  %s7 = sld [smem:[#allocation0]]
  $region34: #{enc_block.3} parent=0
    _
  %s9 = ssub.s32 1, %s7
  %s10 = scalar_select 0, %s9, %s7
  // Predicated region
  $region2: #{enc_block.3} parent=0 // pred_check
    _
  $region3: #{enc_block.3} parent=0 // pred_check_branch
    %12 = sbr.rel (0) target = $region5
  $region4: #{enc_block.3} parent=0 // pred_region
    _
  $region5: #{enc_block.3} parent=0 // pred_fallthru
    _
  // Predicated region
  $region6: #{enc_block.3} parent=0 // pred_check
    _
  $region7: #{enc_block.3} parent=0 // pred_check_branch
    %14 = sbr.rel (0) target = $region9
  $region8: #{enc_block.3} parent=0 // pred_region
    _
  $region9: #{enc_block.3} parent=0 // pred_fallthru
    _
  // Predicated region
  $region10: #{enc_block.3} parent=0 // pred_check
    _
  $region11: #{enc_block.3} parent=0 // pred_check_branch
    %16 = sbr.rel (0) target = $region13
  $region12: #{enc_block.3} parent=0 // pred_region
    _
  $region13: #{enc_block.3} parent=0 // pred_fallthru
    _
  // Predicated region
  $region14: #{enc_block.3} parent=0 // pred_check
    _
  $region15: #{enc_block.3} parent=0 // pred_check_branch
    %18 = sbr.rel (0) target = $region17
  $region16: #{enc_block.3} parent=0 // pred_region
    _
  $region17: #{enc_block.3} parent=0 // pred_fallthru
    _
  %v20 = vld [vmem:[%s0] sm:$0xff]
  %v21 = vld [vmem:[%s0 + $0x8] sm:$0xff]
  %v22 = vld [vmem:[%s0 + $0x10] sm:$0xff]
  %v23 = vld [vmem:[%s0 + $0x18] sm:$0xff]
  %v24 = vld [vmem:[%s2] sm:$0x1]
  %v26 = vlaneseq
  %v27 = vshrl.u32 %v26, 7
  %v28 = vsub.s32 0, %v27
  %v29 = vrot.slane %v24, %v28
  %v31 = vmul.f32 %v20, %v29
  %v32 = vmul.f32 %v21, %v29
  %v33 = vmul.f32 %v22, %v29
  %v34 = vmul.f32 %v23, %v29
  %v35 = vld [vmem:[%s3] sm:$0x1]
  %v37 = vlaneseq
  %v38 = vshrl.u32 %v37, 7
  %v39 = vsub.s32 0, %v38
  %v40 = vrot.slane %v35, %v39
  %v42 = vadd.f32 %v31, %v40
  %v43 = vadd.f32 %v32, %v40
  %v44 = vadd.f32 %v33, %v40
  %v45 = vadd.f32 %v34, %v40
  %v46 = vmax.f32 %v42, 0.0
  %v47 = vmax.f32 %v43, 0.0
  %v48 = vmax.f32 %v44, 0.0
  %v49 = vmax.f32 %v45, 0.0
  %v50 = vlaneseq
  %v51 = vshrl.u32 %v50, 7
  %v52 = vadd.s32 %v51, 8
  %v53 = vadd.s32 %v51, 16
  %v54 = vadd.s32 %v51, 24
  %vm59 = vcmask 1040384
  %v60 = vrot.slane %v46, 7
  %v61 = vrot.slane %v47, 7
  %v62 = vsel %vm59, %v60, %v61
  %v63 = vrot.slane %v48, 7
  %v64 = vsel %vm59, %v61, %v63
  %v65 = vrot.slane %v49, 7
  %v66 = vsel %vm59, %v63, %v65
  %v71 = vsel %vm59, 0.0, %v60
  %vm72 = vcmask 1046528
  %v73 = vrot.slane %v46, 1
  %v74 = vrot.slane %v47, 1
  %v75 = vsel %vm72, %v73, %v74
  %v76 = vrot.slane %v48, 1
  %v77 = vsel %vm72, %v74, %v76
  %v78 = vrot.slane %v49, 1
  %v79 = vsel %vm72, %v76, %v78
  %v84 = vsel %vm72, %v78, 0.0
  %vm85 = vcmp.lt.s32.totalorder %v51, 0
  %v86 = vsub.s32 0, %v51
  %v87 = vsel %vm85, %v86, %v51
  %v88 = vshrl.u32 %v87, 4
  %v89 = vand.u32 %v87, 15
  %v90 = vsub.s32 0, %v89
  %v91 = vsel %vm85, %v90, %v89
  %vm92 = vcmp.lt.s32.totalorder %v52, 0
  %v93 = vsub.s32 0, %v52
  %v94 = vsel %vm92, %v93, %v52
  %v95 = vshrl.u32 %v94, 4
  %v96 = vand.u32 %v94, 15
  %v97 = vsub.s32 0, %v96
  %v98 = vsel %vm92, %v97, %v96
  %vm99 = vcmp.lt.s32.totalorder %v53, 0
  %v100 = vsub.s32 0, %v53
  %v101 = vsel %vm99, %v100, %v53
  %v102 = vshrl.u32 %v101, 4
  %v103 = vand.u32 %v101, 15
  %v104 = vsub.s32 0, %v103
  %v105 = vsel %vm99, %v104, %v103
  %vm106 = vcmp.lt.s32.totalorder %v54, 0
  %v107 = vsub.s32 0, %v54
  %v108 = vsel %vm106, %v107, %v54
  %v109 = vshrl.u32 %v108, 4
  %v110 = vand.u32 %v108, 15
  %v111 = vsub.s32 0, %v110
  %v112 = vsel %vm106, %v111, %v110
  %vm113 = vcmp.ne.s32.totalorder %v91, 0
  %vm114 = vcmp.ne.s32.totalorder %v98, 0
  %vm115 = vcmp.ne.s32.totalorder %v105, 0
  %vm116 = vcmp.ne.s32.totalorder %v112, 0
  %vm117 = vcmp.lt.s32.totalorder %v91, 0
  %vm118 = vcmp.lt.s32.totalorder %v98, 0
  %vm119 = vcmp.lt.s32.totalorder %v105, 0
  %vm120 = vcmp.lt.s32.totalorder %v112, 0
  %vm121 = vmand %vm117, %vm113
  %vm122 = vmand %vm118, %vm114
  %vm123 = vmand %vm119, %vm115
  %vm124 = vmand %vm120, %vm116
  %v125 = vadd.s32 %v91, 16
  %v126 = vadd.s32 %v98, 16
  %v127 = vadd.s32 %v105, 16
  %v128 = vadd.s32 %v112, 16
  %v129 = vsel %vm121, %v125, %v91
  %v130 = vsel %vm122, %v126, %v98
  %v131 = vsel %vm123, %v127, %v105
  %v132 = vsel %vm124, %v128, %v112
  %vm133 = vcmp.eq.s32.totalorder %v129, 0
  %vm134 = vcmp.eq.s32.totalorder %v130, 0
  %vm135 = vcmp.eq.s32.totalorder %v131, 0
  %vm136 = vcmp.eq.s32.totalorder %v132, 0
  %v137 = vsel %vm133, 0.0, %v71
  %v138 = vsel %vm134, 0.0, %v62
  %v139 = vsel %vm135, 0.0, %v64
  %v140 = vsel %vm136, 0.0, %v66
  %vm141 = vcmp.eq.s32.totalorder %v129, 15
  %vm142 = vcmp.eq.s32.totalorder %v130, 15
  %vm143 = vcmp.eq.s32.totalorder %v131, 15
  %vm144 = vcmp.eq.s32.totalorder %v132, 15
  %v145 = vsel %vm141, 0.0, %v75
  %v146 = vsel %vm142, 0.0, %v77
  %v147 = vsel %vm143, 0.0, %v79
  %v148 = vsel %vm144, 0.0, %v84
  %v149 = vpack.c.bf16 %v138, %v137
  %v150 = vpack.c.bf16 %v140, %v139
  %v151 = vpack.c.bf16 %v47, %v46
  %v152 = vpack.c.bf16 %v49, %v48
  %v153 = vpack.c.bf16 %v146, %v145
  %v154 = vpack.c.bf16 %v148, %v147
  %v155 = vld [vmem:[%s1] sm:$0xf]
  %v156 = vld [vmem:[%s1 + $0x4] sm:$0xf]
  %v157 = vld [vmem:[%s1 + $0x8] sm:$0xf]
  %v158 = vld [vmem:[%s1 + $0xc] sm:$0xf]
  %v159 = vld [vmem:[%s1 + $0x10] sm:$0xf]
  %v160 = vld [vmem:[%s1 + $0x14] sm:$0xf]
  %v161 = vld [vmem:[%s1 + $0x18] sm:$0xf]
  %v162 = vld [vmem:[%s1 + $0x1c] sm:$0xf]
  %v163 = vld [vmem:[%s1 + $0x20] sm:$0xf]
  %v164 = vld [vmem:[%s1 + $0x24] sm:$0xf]
  %v165 = vld [vmem:[%s1 + $0x28] sm:$0xf]
  %v166 = vld [vmem:[%s1 + $0x2c] sm:$0xf]
  %v167 = vld [vmem:[%s1 + $0x30] sm:$0xf]
  %v168 = vld [vmem:[%s1 + $0x34] sm:$0xf]
  %v169 = vld [vmem:[%s1 + $0x38] sm:$0xf]
  %v170 = vld [vmem:[%s1 + $0x3c] sm:$0xf]
  %v171 = vld [vmem:[%s1 + $0x40] sm:$0xf]
  %v172 = vld [vmem:[%s1 + $0x44] sm:$0xf]
  %v173 = vld [vmem:[%s1 + $0x48] sm:$0xf]
  %v174 = vld [vmem:[%s1 + $0x4c] sm:$0xf]
  %v175 = vld [vmem:[%s1 + $0x50] sm:$0xf]
  %v176 = vld [vmem:[%s1 + $0x54] sm:$0xf]
  %v177 = vld [vmem:[%s1 + $0x58] sm:$0xf]
  %v178 = vld [vmem:[%s1 + $0x5c] sm:$0xf]
  %v179 = vld [vmem:[%s1 + $0x60] sm:$0xf]
  %v180 = vld [vmem:[%s1 + $0x64] sm:$0xf]
  %v181 = vld [vmem:[%s1 + $0x68] sm:$0xf]
  %v182 = vld [vmem:[%s1 + $0x6c] sm:$0xf]
  %v183 = vld [vmem:[%s1 + $0x70] sm:$0xf]
  %v184 = vld [vmem:[%s1 + $0x74] sm:$0xf]
  %v185 = vld [vmem:[%s1 + $0x78] sm:$0xf]
  %v186 = vld [vmem:[%s1 + $0x7c] sm:$0xf]
  %v187 = vld [vmem:[%s1 + $0x80] sm:$0xf]
  %v188 = vld [vmem:[%s1 + $0x84] sm:$0xf]
  %v189 = vld [vmem:[%s1 + $0x88] sm:$0xf]
  %v190 = vld [vmem:[%s1 + $0x8c] sm:$0xf]
  %v191 = vld [vmem:[%s1 + $0x90] sm:$0xf]
  %v192 = vld [vmem:[%s1 + $0x94] sm:$0xf]
  %v193 = vld [vmem:[%s1 + $0x98] sm:$0xf]
  %v194 = vld [vmem:[%s1 + $0x9c] sm:$0xf]
  %v195 = vld [vmem:[%s1 + $0xa0] sm:$0xf]
  %v196 = vld [vmem:[%s1 + $0xa4] sm:$0xf]
  %v197 = vld [vmem:[%s1 + $0xa8] sm:$0xf]
  %v198 = vld [vmem:[%s1 + $0xac] sm:$0xf]
  %v199 = vld [vmem:[%s1 + $0xb0] sm:$0xf]
  %v200 = vld [vmem:[%s1 + $0xb4] sm:$0xf]
  %v201 = vld [vmem:[%s1 + $0xb8] sm:$0xf]
  %v202 = vld [vmem:[%s1 + $0xbc] sm:$0xf]
  %v251 = vunpack.c.l.b16 %v155
  %v252 = vunpack.c.l.b16 %v156
  %v253 = vunpack.c.l.b16 %v157
  %v254 = vunpack.c.l.b16 %v158
  %v255 = vunpack.c.l.b16 %v159
  %v256 = vunpack.c.l.b16 %v160
  %v257 = vunpack.c.l.b16 %v161
  %v258 = vunpack.c.l.b16 %v162
  %v259 = vunpack.c.l.b16 %v163
  %v260 = vunpack.c.l.b16 %v164
  %v261 = vunpack.c.l.b16 %v165
  %v262 = vunpack.c.l.b16 %v166
  %v263 = vunpack.c.l.b16 %v167
  %v264 = vunpack.c.l.b16 %v168
  %v265 = vunpack.c.l.b16 %v169
  %v266 = vunpack.c.l.b16 %v170
  %v267 = vunpack.c.l.b16 %v171
  %v268 = vunpack.c.l.b16 %v172
  %v269 = vunpack.c.l.b16 %v173
  %v270 = vunpack.c.l.b16 %v174
  %v271 = vunpack.c.l.b16 %v175
  %v272 = vunpack.c.l.b16 %v176
  %v273 = vunpack.c.l.b16 %v177
  %v274 = vunpack.c.l.b16 %v178
  %v275 = vunpack.c.l.b16 %v179
  %v276 = vunpack.c.l.b16 %v180
  %v277 = vunpack.c.l.b16 %v181
  %v278 = vunpack.c.l.b16 %v182
  %v279 = vunpack.c.l.b16 %v183
  %v280 = vunpack.c.l.b16 %v184
  %v281 = vunpack.c.l.b16 %v185
  %v282 = vunpack.c.l.b16 %v186
  %v283 = vunpack.c.l.b16 %v187
  %v284 = vunpack.c.l.b16 %v188
  %v285 = vunpack.c.l.b16 %v189
  %v286 = vunpack.c.l.b16 %v190
  %v287 = vunpack.c.l.b16 %v191
  %v288 = vunpack.c.l.b16 %v192
  %v289 = vunpack.c.l.b16 %v193
  %v290 = vunpack.c.l.b16 %v194
  %v291 = vunpack.c.l.b16 %v195
  %v292 = vunpack.c.l.b16 %v196
  %v293 = vunpack.c.l.b16 %v197
  %v294 = vunpack.c.l.b16 %v198
  %v295 = vunpack.c.l.b16 %v199
  %v296 = vunpack.c.l.b16 %v200
  %v297 = vunpack.c.l.b16 %v201
  %v298 = vunpack.c.l.b16 %v202
  %v299 = vpack.c.b16 %v252, %v251
  %v300 = vpack.c.b16 %v254, %v253
  %v301 = vpack.c.b16 %v256, %v255
  %v302 = vpack.c.b16 %v258, %v257
  %v303 = vpack.c.b16 %v260, %v259
  %v304 = vpack.c.b16 %v262, %v261
  %v305 = vpack.c.b16 %v264, %v263
  %v306 = vpack.c.b16 %v266, %v265
  %v307 = vpack.c.b16 %v268, %v267
  %v308 = vpack.c.b16 %v270, %v269
  %v309 = vpack.c.b16 %v272, %v271
  %v310 = vpack.c.b16 %v274, %v273
  %v311 = vpack.c.b16 %v276, %v275
  %v312 = vpack.c.b16 %v278, %v277
  %v313 = vpack.c.b16 %v280, %v279
  %v314 = vpack.c.b16 %v282, %v281
  %v315 = vpack.c.b16 %v284, %v283
  %v316 = vpack.c.b16 %v286, %v285
  %v317 = vpack.c.b16 %v288, %v287
  %v318 = vpack.c.b16 %v290, %v289
  %v319 = vpack.c.b16 %v292, %v291
  %v320 = vpack.c.b16 %v294, %v293
  %v321 = vpack.c.b16 %v296, %v295
  %v322 = vpack.c.b16 %v298, %v297
  %347 = vmatprep.subr.bf16.mxu0 0
  %348 = vmatpush1.bf16.msra.mxu0 %v299
  %349 = vmatprep.subr.bf16.mxu0 0
  %350 = vmatpush1.bf16.msra.mxu0 %v300
  %351 = vmatprep.subr.bf16.mxu0 0
  %352 = vmatpush1.bf16.msra.mxu0 %v301
  %353 = vmatprep.subr.bf16.mxu0 0
  %354 = vmatpush1.bf16.msra.mxu0 %v302
  %355 = vmatprep.subr.bf16.mxu0 0
  %356 = vmatpush1.bf16.msra.mxu0 %v303
  %357 = vmatprep.subr.bf16.mxu0 0
  %358 = vmatpush1.bf16.msra.mxu0 %v304
  %359 = vmatprep.subr.bf16.mxu0 0
  %360 = vmatpush1.bf16.msra.mxu0 %v305
  %361 = vmatprep.subr.bf16.mxu0 0
  %362 = vmatpush1.bf16.msra.mxu0 %v306
  %363 = vmatprep.subr.bf16.mxu0 0
  %364 = vmatpush1.bf16.msra.mxu0 %v307
  %365 = vmatprep.subr.bf16.mxu0 0
  %366 = vmatpush1.bf16.msra.mxu0 %v308
  %367 = vmatprep.subr.bf16.mxu0 0
  %368 = vmatpush1.bf16.msra.mxu0 %v309
  %369 = vmatprep.subr.bf16.mxu0 0
  %370 = vmatpush1.bf16.msra.mxu0 %v310
  %371 = vmatprep.subr.bf16.mxu0 0
  %372 = vmatpush1.bf16.msra.mxu0 %v311
  %373 = vmatprep.subr.bf16.mxu0 0
  %374 = vmatpush1.bf16.msra.mxu0 %v312
  %375 = vmatprep.subr.bf16.mxu0 0
  %376 = vmatpush1.bf16.msra.mxu0 %v313
  %377 = vmatprep.subr.bf16.mxu0 0
  %378 = vmatpush1.bf16.msra.mxu0 %v314
  %379 = vmatprep.mubr.bf16.mxu0 %v151
  %380 = vmatmul.mubr.bf16.gmra.mrb[0].mxu0 %v149
  %v381 = vpop.f32.mrb[0].mxu0
  %v382 = vadd.f32 0.0, %v381
  %v383 = vpop.f32.mrb[0].mxu0
  %v384 = vpop.f32.mrb[0].mxu0
  %v385 = vadd.f32 0.0, %v384
  %v386 = vpop.f32.mrb[0].mxu0
  %387 = vmatprep.mubr.bf16.mxu0 %v152
  %388 = vmatmul.mubr.bf16.gmra.mrb[0].mxu0 %v150
  %v389 = vpop.f32.mrb[0].mxu0
  %v390 = vadd.f32 0.0, %v389
  %v391 = vpop.f32.mrb[0].mxu0
  %v392 = vpop.f32.mrb[0].mxu0
  %v393 = vadd.f32 0.0, %v392
  %v394 = vpop.f32.mrb[0].mxu0
  %395 = vdwg.mxu0
  %396 = vmatprep.subr.bf16.mxu0 0
  %397 = vmatpush1.bf16.msra.mxu0 %v315
  %398 = vmatprep.subr.bf16.mxu0 0
  %399 = vmatpush1.bf16.msra.mxu0 %v316
  %400 = vmatprep.subr.bf16.mxu0 0
  %401 = vmatpush1.bf16.msra.mxu0 %v317
  %402 = vmatprep.subr.bf16.mxu0 0
  %403 = vmatpush1.bf16.msra.mxu0 %v318
  %404 = vmatprep.subr.bf16.mxu0 0
  %405 = vmatpush1.bf16.msra.mxu0 %v319
  %406 = vmatprep.subr.bf16.mxu0 0
  %407 = vmatpush1.bf16.msra.mxu0 %v320
  %408 = vmatprep.subr.bf16.mxu0 0
  %409 = vmatpush1.bf16.msra.mxu0 %v321
  %410 = vmatprep.subr.bf16.mxu0 0
  %411 = vmatpush1.bf16.msra.mxu0 %v322
  %412 = vmatprep.subr.bf16.mxu0 0
  %413 = vmatpush1.bf16.msra.mxu0 0
  %414 = vmatprep.subr.bf16.mxu0 0
  %415 = vmatpush1.bf16.msra.mxu0 0
  %416 = vmatprep.subr.bf16.mxu0 0
  %417 = vmatpush1.bf16.msra.mxu0 0
  %418 = vmatprep.subr.bf16.mxu0 0
  %419 = vmatpush1.bf16.msra.mxu0 0
  %420 = vmatprep.subr.bf16.mxu0 0
  %421 = vmatpush1.bf16.msra.mxu0 0
  %422 = vmatprep.subr.bf16.mxu0 0
  %423 = vmatpush1.bf16.msra.mxu0 0
  %424 = vmatprep.subr.bf16.mxu0 0
  %425 = vmatpush1.bf16.msra.mxu0 0
  %426 = vmatprep.subr.bf16.mxu0 0
  %427 = vmatpush1.bf16.msra.mxu0 0
  %428 = vmatprep.mubr.bf16.mxu0 0
  %429 = vmatmul.mubr.bf16.gmra.mrb[0].mxu0 %v153
  %v430 = vpop.f32.mrb[0].mxu0
  %v431 = vadd.f32 %v382, %v430
  %v432 = vpop.f32.mrb[0].mxu0
  %v433 = vpop.f32.mrb[0].mxu0
  %v434 = vadd.f32 %v385, %v433
  %v435 = vpop.f32.mrb[0].mxu0
  %436 = vmatprep.mubr.bf16.mxu0 0
  %437 = vmatmul.mubr.bf16.gmra.mrb[0].mxu0 %v154
  %v438 = vpop.f32.mrb[0].mxu0
  %v439 = vadd.f32 %v390, %v438
  %v440 = vpop.f32.mrb[0].mxu0
  %v441 = vpop.f32.mrb[0].mxu0
  %v442 = vadd.f32 %v393, %v441
  %v443 = vpop.f32.mrb[0].mxu0
  %444 = vdwg.mxu0
  %445 = vst [vmem:[%s4] sm:$0xff] %v431
  %446 = vst [vmem:[%s4 + $0x8] sm:$0xff] %v434
  %447 = vst [vmem:[%s4 + $0x10] sm:$0xff] %v439
  %448 = vst [vmem:[%s4 + $0x18] sm:$0xff] %v442
  %v449 = vadd.f32 %v431, %v434
  %v450 = vadd.f32 %v449, %v439
  %v451 = vadd.f32 %v450, %v442
  %v452 = vrot.slane %v451, 4
  %v453 = vadd.f32 %v451, %v452
  %v454 = vrot.slane %v453, 2
  %v455 = vadd.f32 %v453, %v454
  %v456 = vrot.slane %v455, 1
  %v457 = vadd.f32 %v455, %v456
  %v458 = vmul.f32 %v431, %v431
  %v459 = vmul.f32 %v434, %v434
  %v460 = vmul.f32 %v439, %v439
  %v461 = vmul.f32 %v442, %v442
  %v462 = vadd.f32 %v458, %v459
  %v463 = vadd.f32 %v462, %v460
  %v464 = vadd.f32 %v463, %v461
  %v465 = vrot.slane %v464, 4
  %v466 = vadd.f32 %v464, %v465
  %v467 = vrot.slane %v466, 2
  %v468 = vadd.f32 %v466, %v467
  %v469 = vrot.slane %v468, 1
  %v470 = vadd.f32 %v468, %v469
  %v471 = vsel %vm59, %v457, %v470
  %472 = vst [vmem:[%s5] sm:$0x3] %v471
  // Predicated region
  $region18: #{enc_block.3} parent=0 // pred_check
    _
  $region19: #{enc_block.3} parent=0 // pred_check_branch
    %474 = sbr.rel (0) target = $region21
  $region20: #{enc_block.3} parent=0 // pred_region
    _
  $region21: #{enc_block.3} parent=0 // pred_fallthru
    _
  // Predicated region
  $region22: #{enc_block.3} parent=0 // pred_check
    _
  $region23: #{enc_block.3} parent=0 // pred_check_branch
    %476 = sbr.rel (0) target = $region25
  $region24: #{enc_block.3} parent=0 // pred_region
    _
  $region25: #{enc_block.3} parent=0 // pred_fallthru
    _
  // Predicated region
  $region26: #{enc_block.3} parent=0 // pred_check
    _
  $region27: #{enc_block.3} parent=0 // pred_check_branch
    %478 = sbr.rel (0) target = $region29
  $region28: #{enc_block.3} parent=0 // pred_region
    _
  $region29: #{enc_block.3} parent=0 // pred_fallthru
    _
  // Predicated region
  $region30: #{enc_block.3} parent=0 // pred_check
    _
  $region31: #{enc_block.3} parent=0 // pred_check_branch
    %480 = sbr.rel (0) target = $region33
  $region32: #{enc_block.3} parent=0 // pred_region
    _
  $region33: #{enc_block.3} parent=0 // pred_fallthru
    _

</llo_original>
